<compile_context>
chip_gen: v5e
topology: v5e:2x2
jax: 0.10.0
libtpu: 0.0.40
codegen_flags: <defaults>
</compile_context>

<pallas_src>
import jax
import jax.numpy as jnp
from jax.experimental import pallas as pl
from jax.experimental.pallas import tpu as pltpu


# ----------------------------------------------------------------------------
# Host-side (hoisted) resampling-matrix construction — computed once per call.
# ----------------------------------------------------------------------------
def _bicubic_matrix(out_size: int, in_size: int) -> jnp.ndarray:
    """(out_size, in_size) bicubic resampling matrix, PyTorch convention
    (align_corners=False, A=-0.75, border taps clamped)."""
    A = -0.75
    scale = in_size / out_size
    i = jnp.arange(out_size, dtype=jnp.float32)
    src = (i + 0.5) * scale - 0.5
    i0 = jnp.floor(src)

    def _cub(t):
        at = jnp.abs(t)
        w1 = ((A + 2.0) * at - (A + 3.0)) * at * at + 1.0
        w2 = (((at - 5.0) * at + 8.0) * at - 4.0) * A
        return jnp.where(at <= 1.0, w1, jnp.where(at < 2.0, w2, 0.0))

    taps = i0[:, None] + jnp.arange(-1.0, 3.0, dtype=jnp.float32)[None, :]   # (out, 4)
    w = _cub(src[:, None] - taps)                                            # (out, 4)
    idx = jnp.clip(taps, 0.0, in_size - 1.0).astype(jnp.int32)               # (out, 4)
    onehot = (idx[:, :, None] ==
              jnp.arange(in_size, dtype=jnp.int32)[None, None, :]).astype(jnp.float32)
    return jnp.sum(onehot * w[:, :, None], axis=1)                           # (out, in)


def _nearest_exact_matrix(out_size: int, in_size: int) -> jnp.ndarray:
    """(out_size, in_size) NEAREST_EXACT selection matrix."""
    i = jnp.arange(out_size, dtype=jnp.float32)
    idx = jnp.clip(jnp.floor((i + 0.5) * (in_size / out_size)),
                   0.0, in_size - 1.0).astype(jnp.int32)
    return (idx[:, None] ==
            jnp.arange(in_size, dtype=jnp.int32)[None, :]).astype(jnp.float32)


def _fit_size(in_hw, target_hw):
    """Aspect-preserving size that fits inside target_hw."""
    H, W = in_hw
    TH, TW = target_hw
    if H * TW >= W * TH:          # height-limited
        new_h = TH
        new_w = max(1, min(TW, int(round(W * TH / H))))
    else:                         # width-limited
        new_w = TW
        new_h = max(1, min(TH, int(round(H * TW / W))))
    return new_h, new_w


def _embed_rows(mat, total_rows: int, offset: int) -> jnp.ndarray:
    """Place `mat` (n, in) at rows [offset, offset+n) of a zero (total_rows, in)
    matrix — folds the centered zero-padding into the resample matmul."""
    full = jnp.zeros((total_rows, mat.shape[1]), jnp.float32)
    return full.at[offset:offset + mat.shape[0], :].set(mat)


def _build_matrices(in_hw, target_hw, mode, dtype):
    H, W = in_hw
    TH, TW = target_hw
    new_h, new_w = _fit_size((H, W), (TH, TW))
    top, left = (TH - new_h) // 2, (TW - new_w) // 2
    mat_fn = _bicubic_matrix if mode == "bicubic" else _nearest_exact_matrix
    ph = _embed_rows(mat_fn(new_h, H), TH, top).astype(dtype)       # (TH, H)
    pwt = _embed_rows(mat_fn(new_w, W), TW, left).T.astype(dtype)   # (W, TW)
    return ph, pwt


# ----------------------------------------------------------------------------
# Block-size selection (VMEM-budgeted; targets >= ~8 pipelined grid steps).
# ----------------------------------------------------------------------------
_MAX_UNROLL_PLANES = 16
_VMEM_DATA_BUDGET = 32 * 1024 * 1024   # data tiles, double-buffered (fits v7x 64 MiB)


def _choose_plane_block(P, H, W, TH, TW, in_itemsize, out_itemsize):
    per_plane = 2 * (H * W * in_itemsize + TH * TW * out_itemsize)   # double-buffered
    max_by_vmem = max(1, _VMEM_DATA_BUDGET // max(per_plane, 1))
    target = pl.cdiv(P, 8)               # aim for ~8 grid steps of DMA/compute overlap
    min_blk = 2 if P >= 4 else 1         # amortize per-step overhead / enable N-packing
    return int(max(1, min(P, max_by_vmem, max(target, min_blk), _MAX_UNROLL_PLANES)))


# ----------------------------------------------------------------------------
# Kernel factory: one grid step resamples P_BLK planes of one tensor.
# ----------------------------------------------------------------------------
def _make_resize_kernel(p_blk, height_first, pair, compute_dtype):
    """out_p = Ph @ plane_p @ Pw^T, per plane.

    * No Ph broadcast and no (P,TH,TW) batched intermediate: each plane's two
      2-D MXU matmuls run and its (TH,TW) slab is stored immediately, keeping
      the live set to one plane.
    * `height_first` picks the cheaper contraction order (static, per shape).
    * `pair` (width-first only): Ph is shared across planes, so two planes'
      width-pass results are concatenated along lanes -> N = 2*TW fills the
      256-wide MXU on v6e/v7x with zero extra FLOPs.
    """
    def kernel(ph_ref, pwt_ref, src_ref, dst_ref):
        ph = ph_ref[...]
        pwt = pwt_ref[...]
        tw = dst_ref.shape[-1]

        def resample_one(plane):
            if height_first:
                tmp = jnp.dot(ph, plane, preferred_element_type=jnp.float32)
                return jnp.dot(tmp.astype(compute_dtype), pwt,
                               preferred_element_type=jnp.float32)
            tmp = jnp.dot(plane, pwt, preferred_element_type=jnp.float32)
            return jnp.dot(ph, tmp.astype(compute_dtype),
                           preferred_element_type=jnp.float32)

        if pair and (not height_first) and p_blk >= 2:
            for p0 in range(0, p_blk - 1, 2):
                a = src_ref[p0].astype(compute_dtype)
                b = src_ref[p0 + 1].astype(compute_dtype)
                xa = jnp.dot(a, pwt, preferred_element_type=jnp.float32)
                xb = jnp.dot(b, pwt, preferred_element_type=jnp.float32)
                xab = jnp.concatenate([xa, xb], axis=-1).astype(compute_dtype)
                oab = jnp.dot(ph, xab, preferred_element_type=jnp.float32)
                dst_ref[p0] = oab[:, :tw].astype(dst_ref.dtype)
                dst_ref[p0 + 1] = oab[:, tw:].astype(dst_ref.dtype)
            if p_blk % 2:
                p = p_blk - 1
                dst_ref[p] = resample_one(
                    src_ref[p].astype(compute_dtype)).astype(dst_ref.dtype)
        else:
            for p in range(p_blk):
                dst_ref[p] = resample_one(
                    src_ref[p].astype(compute_dtype)).astype(dst_ref.dtype)

    return kernel


# ----------------------------------------------------------------------------
# Pallas wrapper for one tensor
# ----------------------------------------------------------------------------
def _resize_planes_pallas(planes, ph, pwt, out_dtype):
    P, H, W = planes.shape
    TH = ph.shape[0]
    TW = pwt.shape[1]
    in_b = planes.dtype.itemsize
    out_b = jnp.dtype(out_dtype).itemsize

    p_blk = _choose_plane_block(P, H, W, TH, TW, in_b, out_b)
    p_pad = pl.cdiv(P, p_blk) * p_blk
    if p_pad != P:   # ragged plane count: pad to a block multiple (cheap, in HBM)
        planes = jnp.pad(planes, ((0, p_pad - P), (0, 0), (0, 0)))
    grid = (p_pad // p_blk,)

    # Pick the cheaper contraction order (identical result, fewer MXU FLOPs).
    height_first = TH * W * (H + TW) < H * TW * (W + TH)
    pair = (not height_first) and (TW < 256) and (p_blk >= 2)
    compute_dtype = ph.dtype

    flops_per_plane = (TH * H * W + TH * W * TW) if height_first \
        else (H * W * TW + TH * H * TW)
    cost = pl.CostEstimate(
        flops=2 * p_pad * flops_per_plane,
        transcendentals=0,
        bytes_accessed=int(p_pad * (H * W * in_b + TH * TW * out_b)
                           + (TH * H + W * TW) * ph.dtype.itemsize))

    kernel = _make_resize_kernel(p_blk, height_first, pair, compute_dtype)

    out = pl.pallas_call(
        kernel,
        out_shape=jax.ShapeDtypeStruct((p_pad, TH, TW), out_dtype),
        grid_spec=pltpu.PrefetchScalarGridSpec(
            num_scalar_prefetch=0,
            grid=grid,
            in_specs=[
                pl.BlockSpec((TH, H), lambda i: (0, 0)),        # Ph  (grid-invariant)
                pl.BlockSpec((W, TW), lambda i: (0, 0)),        # Pw^T (grid-invariant)
                pl.BlockSpec((p_blk, H, W), lambda i: (i, 0, 0)),
            ],
            out_specs=pl.BlockSpec((p_blk, TH, TW), lambda i: (i, 0, 0)),
        ),
        compiler_params=pltpu.CompilerParams(
            dimension_semantics=("parallel",),
            vmem_limit_bytes=48 * 1024 * 1024,
        ),
        cost_estimate=cost,
    )(ph, pwt, planes)
    return out[:P]


def _resize_one(arr, target_hw, mode):
    B, C, H, W = arr.shape
    TH, TW = target_hw
    # bf16 inputs keep a native bf16 MXU path; otherwise f32 matrices.
    mat_dtype = jnp.bfloat16 if arr.dtype == jnp.bfloat16 else jnp.float32
    ph, pwt = _build_matrices((H, W), (TH, TW), mode, mat_dtype)
    planes = arr.reshape(B * C, H, W)          # fold B*C in the wrapper (free in HBM)
    out = _resize_planes_pallas(planes, ph, pwt, arr.dtype)
    return out.reshape(B, C, TH, TW)


def resize_and_pad(t, target_shape):
    """Forward pass of ResizeAndPad: x -> BICUBIC, y -> NEAREST_EXACT, both
    aspect-preserving-resized and centered-zero-padded to target_shape."""
    TH, TW = int(target_shape[0]), int(target_shape[1])
    out = list(t)
    out[0] = _resize_one(t[0], (TH, TW), "bicubic")
    out[1] = _resize_one(t[1], (TH, TW), "nearest_exact")
    return tuple(out)


# ----------------------------------------------------------------------------
# Pure-JAX reference (same matrices, einsum) for validation
# ----------------------------------------------------------------------------
def _resize_one_reference(arr, target_hw, mode):
    B, C, H, W = arr.shape
    TH, TW = target_hw
    ph, pwt = _build_matrices((H, W), (TH, TW), mode, jnp.float32)
    planes = arr.reshape(B * C, H, W).astype(jnp.float32)
    out = jnp.einsum("th,phw,wv->ptv", ph, planes, pwt)
    return out.reshape(B, C, TH, TW).astype(arr.dtype)


# ----------------------------------------------------------------------------
# Demo / smoke test
# ----------------------------------------------------------------------------
if __name__ == "__main__":
    key = jax.random.PRNGKey(0)
    kx, ky, kz = jax.random.split(key, 3)

    # Primary demo: NCHW pair (x = image stack, y = paired mask), upscale path.
    x = jax.random.normal(kx, (2, 4, 20, 16), dtype=jnp.float32)
    y = (jax.random.uniform(ky, (2, 1, 20, 16)) < 0.5).astype(jnp.float32)
    target = (64, 128)

    out_x, out_y = resize_and_pad((x, y), target)
    jax.block_until_ready(out_x)
    jax.block_until_ready(out_y)

    assert out_x.shape == (2, 4, target[0], target[1]) and out_x.dtype == x.dtype
    assert out_y.shape == (2, 1, target[0], target[1]) and out_y.dtype == y.dtype

    # Validate against the pure-JAX reference.
    ref_x = _resize_one_reference(x, target, "bicubic")
    ref_y = _resize_one_reference(y, target, "nearest_exact")
    assert bool(jnp.allclose(out_x, ref_x, atol=5e-2, rtol=5e-2))
    assert bool(jnp.allclose(out_y, ref_y, atol=1e-6))

    # Nearest-exact on a binary mask stays exactly binary / zero in the pad.
    assert bool(jnp.all((out_y == 0.0) | (out_y == 1.0)))

    # Centered zero-padding columns are exactly zero.
    new_h, new_w = _fit_size((20, 16), target)
    left = (target[1] - new_w) // 2
    if left > 0:
        assert bool(jnp.all(out_x[..., :, :left] == 0.0))
        assert bool(jnp.all(out_x[..., :, left + new_w:] == 0.0))

    # Secondary check: a shape that selects the width-first order + paired
    # height pass (N = 2*TW MXU packing), validated against the reference.
    z = jax.random.normal(kz, (2, 4, 8, 32), dtype=jnp.float32)
    tgt2 = (128, 16)
    out_z = _resize_one(z, tgt2, "bicubic")
    jax.block_until_ready(out_z)
    ref_z = _resize_one_reference(z, tgt2, "bicubic")
    assert out_z.shape == (2, 4, 128, 16)
    assert bool(jnp.allclose(out_z, ref_z, atol=5e-2, rtol=5e-2))

    print("KERNEL_OK")
</pallas_src>

<mosaic_0001>
module attributes {stable_mosaic.version = 11 : i64} {
  func.func @kernel(%arg0: i32, %arg1: memref<64x20xf32, #tpu.memory_space<vmem>>, %arg2: memref<16x128xf32, #tpu.memory_space<vmem>>, %arg3: memref<2x20x16xf32, #tpu.memory_space<vmem>>, %arg4: memref<2x64x128xf32, #tpu.memory_space<vmem>>) attributes {dimension_semantics = [#tpu.dimension_semantics<parallel>], iteration_bounds = array<i64: 4>, scalar_prefetch = 0 : i64, scratch_operands = 0 : i64, tpu.core_type = #tpu.core_type<tc>, window_params = [{pipeline_mode = #tpu.pipeline_mode<synchronous>, transform_indices = @transform_0, window_bounds = array<i64: 64, 20>}, {pipeline_mode = #tpu.pipeline_mode<synchronous>, transform_indices = @transform_1, window_bounds = array<i64: 16, 128>}, {transform_indices = @transform_2, window_bounds = array<i64: 2, 20, 16>}, {transform_indices = @transform_3, window_bounds = array<i64: 2, 64, 128>}]} {
    %c0 = arith.constant 0 : index
    %c0_0 = arith.constant 0 : index
    %0 = vector.load %arg1[%c0, %c0_0] : memref<64x20xf32, #tpu.memory_space<vmem>>, vector<64x20xf32>
    %c0_1 = arith.constant 0 : index
    %c0_2 = arith.constant 0 : index
    %1 = vector.load %arg2[%c0_1, %c0_2] : memref<16x128xf32, #tpu.memory_space<vmem>>, vector<16x128xf32>
    %c0_3 = arith.constant 0 : index
    %c0_4 = arith.constant 0 : index
    %c0_5 = arith.constant 0 : index
    %2 = vector.load %arg3[%c0_3, %c0_4, %c0_5] : memref<2x20x16xf32, #tpu.memory_space<vmem>>, vector<1x20x16xf32>
    %3 = vector.shape_cast %2 : vector<1x20x16xf32> to vector<20x16xf32>
    %cst = arith.constant dense<0.000000e+00> : vector<64x16xf32>
    %4 = tpu.matmul %0, %3, %cst {dimension_numbers = #tpu.dot_dimension_numbers<[1], [0], [0], [1], [0, 0, 1, 1], [], []>} : vector<64x20xf32>, vector<20x16xf32>, vector<64x16xf32> -> vector<64x16xf32>
    %cst_6 = arith.constant dense<0.000000e+00> : vector<64x128xf32>
    %5 = tpu.matmul %4, %1, %cst_6 {dimension_numbers = #tpu.dot_dimension_numbers<[1], [0], [0], [1], [0, 0, 1, 1], [], []>} : vector<64x16xf32>, vector<16x128xf32>, vector<64x128xf32> -> vector<64x128xf32>
    %c0_7 = arith.constant 0 : index
    %c0_8 = arith.constant 0 : index
    %c0_9 = arith.constant 0 : index
    %6 = vector.load %arg4[%c0_7, %c0_8, %c0_9] : memref<2x64x128xf32, #tpu.memory_space<vmem>>, vector<1x64x128xf32>
    %7 = vector.shape_cast %6 : vector<1x64x128xf32> to vector<64x128xf32>
    %8 = vector.shape_cast %5 : vector<64x128xf32> to vector<1x64x128xf32>
    tpu.vector_store %arg4[%c0_7, %c0_8, %c0_9], %8 {strides = array<i32>} : memref<2x64x128xf32, #tpu.memory_space<vmem>>, vector<1x64x128xf32>,
    %c1 = arith.constant 1 : index
    %c0_10 = arith.constant 0 : index
    %c0_11 = arith.constant 0 : index
    %9 = vector.load %arg3[%c1, %c0_10, %c0_11] : memref<2x20x16xf32, #tpu.memory_space<vmem>>, vector<1x20x16xf32>
    %10 = vector.shape_cast %9 : vector<1x20x16xf32> to vector<20x16xf32>
    %cst_12 = arith.constant dense<0.000000e+00> : vector<64x16xf32>
    %11 = tpu.matmul %0, %10, %cst_12 {dimension_numbers = #tpu.dot_dimension_numbers<[1], [0], [0], [1], [0, 0, 1, 1], [], []>} : vector<64x20xf32>, vector<20x16xf32>, vector<64x16xf32> -> vector<64x16xf32>
    %cst_13 = arith.constant dense<0.000000e+00> : vector<64x128xf32>
    %12 = tpu.matmul %11, %1, %cst_13 {dimension_numbers = #tpu.dot_dimension_numbers<[1], [0], [0], [1], [0, 0, 1, 1], [], []>} : vector<64x16xf32>, vector<16x128xf32>, vector<64x128xf32> -> vector<64x128xf32>
    %c1_14 = arith.constant 1 : index
    %c0_15 = arith.constant 0 : index
    %c0_16 = arith.constant 0 : index
    %13 = vector.load %arg4[%c1_14, %c0_15, %c0_16] : memref<2x64x128xf32, #tpu.memory_space<vmem>>, vector<1x64x128xf32>
    %14 = vector.shape_cast %13 : vector<1x64x128xf32> to vector<64x128xf32>
    %15 = vector.shape_cast %12 : vector<64x128xf32> to vector<1x64x128xf32>
    tpu.vector_store %arg4[%c1_14, %c0_15, %c0_16], %15 {strides = array<i32>} : memref<2x64x128xf32, #tpu.memory_space<vmem>>, vector<1x64x128xf32>,
    return
  }
  func.func @transform_0(%arg0: i32) -> (i32, i32) {
    %c0_i32 = arith.constant 0 : i32
    %c0_i32_0 = arith.constant 0 : i32
    %c0_i32_1 = arith.constant 0 : i32
    return %c0_i32, %c0_i32_0 : i32, i32
  }
  func.func @transform_1(%arg0: i32) -> (i32, i32) {
    %c0_i32 = arith.constant 0 : i32
    %c0_i32_0 = arith.constant 0 : i32
    %c0_i32_1 = arith.constant 0 : i32
    return %c0_i32, %c0_i32_0 : i32, i32
  }
  func.func @transform_2(%arg0: i32) -> (i32, i32, i32) {
    %c0_i32 = arith.constant 0 : i32
    %c0_i32_0 = arith.constant 0 : i32
    %c0_i32_1 = arith.constant 0 : i32
    return %arg0, %c0_i32, %c0_i32_0 : i32, i32, i32
  }
  func.func @transform_3(%arg0: i32) -> (i32, i32, i32) {
    %c0_i32 = arith.constant 0 : i32
    %c0_i32_0 = arith.constant 0 : i32
    %c0_i32_1 = arith.constant 0 : i32
    return %arg0, %c0_i32, %c0_i32_0 : i32, i32, i32
  }
}

</mosaic_0001>

<llo_original>
// kernel: tpu_custom_call.1
$region0: #{tpu_custom_call.1}
  #allocation0 [shape = 'u32[]', space=smem, size = 0x4, offset = 0x4, fixed_abs, tag = 'smem constant byte address 0x4 - core index']
  #allocation1 [shape = 'u32[72,128]{1,0:T(1,128)}', space=vmem, size = 0x9000, scoped, tag = 'internal scratch']
  %s0 = inlined_call_operand.vmem [shape: f32[64,20], index: 0, kind: input, shape index: {}]
  %s1 = inlined_call_operand.vmem [shape: f32[16,128], index: 1, kind: input, shape index: {}]
  %s2 = inlined_call_operand.vmem [shape: f32[8,20,16], index: 2, kind: input, shape index: {}]
  %s3 = inlined_call_operand.hbm [shape: f32[8,64,128], index: 3, kind: output, shape index: {}]
  %s4 = sld [smem:[#allocation0]]
  $region45: #{tpu_custom_call.1} parent=0
    _
  %s6 = ssub.s32 1, %s4
  %s7 = scalar_select 0, %s6, %s4
  $region1: #{tpu_custom_call.1} parent=0
    #allocation2 [shape = 'u8[131072]{0}', space=vmem, size = 0x20000, scoped, tag = 'output window, operand 0']
    #allocation3 [shape = 's32[2]{0}', space=sflag, size = 0x8, scoped, tag = 'scoped memory for tpu_custom_call.1']
    %8 = vsyncpa [#allocation3], 0
    %s9 = scalar_lea.sflag [#allocation3], 1
    %10 = vsyncpa %s9, 0
    loop: start=0, step=1, limit=6
    $region2: #{tpu_custom_call.1} parent=1 // loop_pre_header
      _
    $region3: #{tpu_custom_call.1} parent=1 // loop_header
      %s12 = sphi 0, %s16
      %p13 = scmp.ge.s32.totalorder %s12, 6
      %s20 = sphi 0, %s20
      %s22 = sphi 0, %s20
      %s23 = sphi 0, %s22
      %s37 = sphi 0, %s23
      %s41 = sphi 0, %s41
      %s43 = sphi 0, %s41
      %s44 = sphi 0, %s43
      %s58 = sphi 0, %s44
      %s64 = sphi 0, %s66
      %s67 = sphi 0, %s64
      %s68 = sphi 0, %s67
      %s84 = sphi 0, %s68
      %s90 = sphi 0, %s92
      %s93 = sphi 0, %s90
      %s94 = sphi 0, %s93
      %s110 = sphi 0, %s94
    $region4: #{tpu_custom_call.1} parent=1 // loop_header_branch
      %15 = sbr.rel (%p13) target = $region8
    $region5: #{tpu_custom_call.1} parent=1 // loop_body
      %s17 = ssub.s32 %s12, 1
      %s18 = ssub.s32 %s12, 2
      %s19 = sadd.s32 %s12, 1
      %s21 = sadd.s32 %s20, 1
      %p24 = scmp.eq.s32.totalorder %s12, 3
      %p25 = scmp.ne.s32.totalorder %s20, %s22
      %p26 = scmp.eq.s32.totalorder %s12, 0
      %p27 = por %p25, %p26
      %p28 = scmp.ne.s32.totalorder %s20, %s22
      %p29 = scmp.eq.s32.totalorder %s17, 3
      %p30 = por %p28, %p29
      %p31 = scmp.ne.s32.totalorder %s22, %s23
      %p32 = scmp.eq.s32.totalorder %s17, 0
      %p33 = por %p31, %p32
      %p34 = scmp.ne.s32.totalorder %s22, %s23
      %p35 = scmp.eq.s32.totalorder %s18, 3
      %p36 = por %p34, %p35
      %p38 = scmp.ne.s32.totalorder %s23, %s37
      %p39 = scmp.eq.s32.totalorder %s18, 0
      %p40 = por %p38, %p39
      %s42 = sadd.s32 %s41, 1
      %p45 = scmp.eq.s32.totalorder %s12, 3
      %p46 = scmp.ne.s32.totalorder %s41, %s43
      %p47 = scmp.eq.s32.totalorder %s12, 0
      %p48 = por %p46, %p47
      %p49 = scmp.ne.s32.totalorder %s41, %s43
      %p50 = scmp.eq.s32.totalorder %s17, 3
      %p51 = por %p49, %p50
      %p52 = scmp.ne.s32.totalorder %s43, %s44
      %p53 = scmp.eq.s32.totalorder %s17, 0
      %p54 = por %p52, %p53
      %p55 = scmp.ne.s32.totalorder %s43, %s44
      %p56 = scmp.eq.s32.totalorder %s18, 3
      %p57 = por %p55, %p56
      %p59 = scmp.ne.s32.totalorder %s44, %s58
      %p60 = scmp.eq.s32.totalorder %s18, 0
      %p61 = por %p59, %p60
      %s62 = ssub.s32 %s12, %s19
      %p63 = scmp.eq.s32.totalorder %s62, 0
      %s65 = sadd.s32 %s64, 1
      %s66 = scalar_select %p63, %s64, %s65
      %p69 = pneg %p63
      %p70 = scmp.eq.s32.totalorder %s12, 3
      %p71 = por %p69, %p70
      %p72 = scmp.ne.s32.totalorder %s64, %s67
      %p73 = scmp.eq.s32.totalorder %s12, 0
      %p74 = por %p72, %p73
      %p75 = scmp.ne.s32.totalorder %s64, %s67
      %p76 = scmp.eq.s32.totalorder %s17, 3
      %p77 = por %p75, %p76
      %p78 = scmp.ne.s32.totalorder %s67, %s68
      %p79 = scmp.eq.s32.totalorder %s17, 0
      %p80 = por %p78, %p79
      %p81 = scmp.ne.s32.totalorder %s67, %s68
      %p82 = scmp.eq.s32.totalorder %s18, 3
      %p83 = por %p81, %p82
      %p85 = scmp.ne.s32.totalorder %s68, %s84
      %p86 = scmp.eq.s32.totalorder %s18, 0
      %p87 = por %p85, %p86
      %s88 = ssub.s32 %s12, %s19
      %p89 = scmp.eq.s32.totalorder %s88, 0
      %s91 = sadd.s32 %s90, 1
      %s92 = scalar_select %p89, %s90, %s91
      %p95 = pneg %p89
      %p96 = scmp.eq.s32.totalorder %s12, 3
      %p97 = por %p95, %p96
      %p98 = scmp.ne.s32.totalorder %s90, %s93
      %p99 = scmp.eq.s32.totalorder %s12, 0
      %p100 = por %p98, %p99
      %p101 = scmp.ne.s32.totalorder %s90, %s93
      %p102 = scmp.eq.s32.totalorder %s17, 3
      %p103 = por %p101, %p102
      %p104 = scmp.ne.s32.totalorder %s93, %s94
      %p105 = scmp.eq.s32.totalorder %s17, 0
      %p106 = por %p104, %p105
      %p107 = scmp.ne.s32.totalorder %s93, %s94
      %p108 = scmp.eq.s32.totalorder %s18, 3
      %p109 = por %p107, %p108
      %p111 = scmp.ne.s32.totalorder %s94, %s110
      %p112 = scmp.eq.s32.totalorder %s18, 0
      %p113 = por %p111, %p112
      %p114 = scmp.le.s32.totalorder 1, %s12
      %p115 = scmp.lt.s32.totalorder %s12, 5
      %p116 = pnand %p114, %p115
      %p117 = pneg %p116
      // Predicated region
      $region9: #{tpu_custom_call.1} parent=5 // pred_check
        _
      $region10: #{tpu_custom_call.1} parent=5 // pred_check_branch
        %119 = sbr.rel (%p116) target = $region12
      $region11: #{tpu_custom_call.1} parent=5 // pred_region
        %s120 = ssub.s32 %s12, 1
        // Predicated region
        $region13: #{tpu_custom_call.1} parent=11 // pred_check
          %p121 = pneg %p33
        $region14: #{tpu_custom_call.1} parent=11 // pred_check_branch
          %123 = sbr.rel (%p121) target = $region16
        $region15: #{tpu_custom_call.1} parent=11 // pred_region
          _
        $region16: #{tpu_custom_call.1} parent=11 // pred_fallthru
          _
        // Predicated region
        $region17: #{tpu_custom_call.1} parent=11 // pred_check
          %p124 = pneg %p54
        $region18: #{tpu_custom_call.1} parent=11 // pred_check_branch
          %126 = sbr.rel (%p124) target = $region20
        $region19: #{tpu_custom_call.1} parent=11 // pred_region
          _
        $region20: #{tpu_custom_call.1} parent=11 // pred_fallthru
          _
      $region12: #{tpu_custom_call.1} parent=5 // pred_fallthru
        _
      %p127 = scmp.lt.s32.totalorder %s12, 4
      // Predicated region
      $region21: #{tpu_custom_call.1} parent=5 // pred_check
        %p128 = pneg %p127
      $region22: #{tpu_custom_call.1} parent=5 // pred_check_branch
        %130 = sbr.rel (%p128) target = $region24
      $region23: #{tpu_custom_call.1} parent=5 // pred_region
        // Predicated region
        $region25: #{tpu_custom_call.1} parent=23 // pred_check
          %p131 = pneg %p74
        $region26: #{tpu_custom_call.1} parent=23 // pred_check_branch
          %133 = sbr.rel (%p131) target = $region28
        $region27: #{tpu_custom_call.1} parent=23 // pred_region
          %s134 = smul.u32 2, %s12
          %p135 = scmp.lt.s32.totalorder %s134, 7
          %s136 = scalar_select %p135, %s134, 7
          %s137 = smul.addr %s136, 3
          %s138 = smul.addr %s137, 8
          %s139 = scalar_lea.vmem %s2, %s138
          %s140 = smul.u32 2, %s12
        $region28: #{tpu_custom_call.1} parent=23 // pred_fallthru
          _
      $region24: #{tpu_custom_call.1} parent=5 // pred_fallthru
        _
      %p141 = scmp.le.s32.totalorder 1, %s12
      %p142 = scmp.lt.s32.totalorder %s12, 5
      %p143 = pnand %p141, %p142
      %p144 = pneg %p143
      // Predicated region
      $region29: #{tpu_custom_call.1} parent=5 // pred_check
        _
      $region30: #{tpu_custom_call.1} parent=5 // pred_check_branch
        %146 = sbr.rel (%p143) target = $region32
      $region31: #{tpu_custom_call.1} parent=5 // pred_region
        %s147 = ssub.s32 %s12, 1
        %p148 = pneg %p33
        %p149 = pneg %p30
        %p150 = pneg %p54
        %p151 = pneg %p51
        %s152 = smul.u32 2, %s17
        %p153 = scmp.lt.s32.totalorder %s152, 7
        %s154 = scalar_select %p153, %s152, 7
        %s155 = smul.addr %s154, 3
        %s156 = smul.addr %s155, 8
        %s157 = scalar_lea.vmem %s2, %s156
        %p158 = pneg %p80
        %p159 = pneg %p77
        %p160 = pneg %p106
        %p161 = pneg %p103
        %s162 = sand.u32 %s93, 1
        %s163 = scalar_lea.sflag [#allocation3], %s162
        %s164 = sand.u32 %s93, 1
        %s165 = smul.addr %s164, 128
        %s166 = scalar_lea.vmem [#allocation2], %s165
        %s167 = smul.u32 2, %s17
        %p168 = scmp.lt.s32.totalorder %s167, 7
        %s169 = scalar_select %p168, %s167, 7
        %s170 = smul.addr %s169, 3
        %s171 = smul.addr %s170, 8
        %s172 = scalar_lea.vmem %s2, %s171
        %s173 = smul.u32 2, %s17
        %s174 = smul.u32 2, %s17
        %v175 = vld [vmem:[%s0] sm:$0xff]
        %v176 = vld [vmem:[%s0 + $0x8] sm:$0xff]
        %v177 = vld [vmem:[%s0 + $0x10] sm:$0xff]
        %v178 = vld [vmem:[%s0 + $0x18] sm:$0xff]
        %v179 = vld [vmem:[%s0 + $0x20] sm:$0xff]
        %v180 = vld [vmem:[%s0 + $0x28] sm:$0xff]
        %v181 = vld [vmem:[%s0 + $0x30] sm:$0xff]
        %v182 = vld [vmem:[%s0 + $0x38] sm:$0xff]
        %v183 = vld [vmem:[%s1] sm:$0xff]
        %v184 = vld [vmem:[%s1 + $0x8] sm:$0xff]
        %v185 = vld [vmem:[%s172] sm:$0xff]
        %v186 = vld [vmem:[%s172 + $0x8] sm:$0xff]
        %v187 = vld [vmem:[%s172 + $0x10] sm:$0xf]
        %vm188 = vcmask 162816
        %v190 = vsel %vm188, %v175, 0
        %v193 = vsel %vm188, %v176, 0
        %v196 = vsel %vm188, %v177, 0
        %v199 = vsel %vm188, %v178, 0
        %v202 = vsel %vm188, %v179, 0
        %v205 = vsel %vm188, %v180, 0
        %v208 = vsel %vm188, %v181, 0
        %v211 = vsel %vm188, %v182, 0
        %vm213 = vcmask 1043456
        %v215 = vsel %vm213, %v187, 0
        %217 = vmatpush.msra.mxu0 0.0
        %218 = vmatpush.msra.mxu0 0.0
        %219 = vmatpush.msra.mxu0 0.0
        %220 = vmatpush.msra.mxu0 0.0
        %221 = vmatpush.msra.mxu0 0.0
        %222 = vmatpush.msra.mxu0 0.0
        %223 = vmatpush.msra.mxu0 0.0
        %224 = vmatpush.msra.mxu0 0.0
        %225 = vmatpush.msra.mxu0 0.0
        %226 = vmatpush.msra.mxu0 0.0
        %227 = vmatpush.msra.mxu0 0.0
        %228 = vmatpush.msra.mxu0 0.0
        %229 = vmatpush.msra.mxu0 0.0
        %230 = vmatpush.msra.mxu0 %v215
        %231 = vmatpush.msra.mxu0 %v186
        %232 = vmatpush.msra.mxu0 %v185
        %233 = vmatmul.f32.gmra.mxu0 %v190
        %v234 = vpop.f32.mrf.mxu0
        %v235 = vadd.f32 0.0, %v234
        %236 = vmatmul.f32.gmra.mxu0 %v193
        %v237 = vpop.f32.mrf.mxu0
        %v238 = vadd.f32 0.0, %v237
        %239 = vmatmul.f32.gmra.mxu0 %v196
        %v240 = vpop.f32.mrf.mxu0
        %v241 = vadd.f32 0.0, %v240
        %242 = vmatmul.f32.gmra.mxu0 %v199
        %v243 = vpop.f32.mrf.mxu0
        %v244 = vadd.f32 0.0, %v243
        %245 = vmatmul.f32.gmra.mxu0 %v202
        %v246 = vpop.f32.mrf.mxu0
        %v247 = vadd.f32 0.0, %v246
        %248 = vmatmul.f32.gmra.mxu0 %v205
        %v249 = vpop.f32.mrf.mxu0
        %v250 = vadd.f32 0.0, %v249
        %251 = vmatmul.f32.gmra.mxu0 %v208
        %v252 = vpop.f32.mrf.mxu0
        %v253 = vadd.f32 0.0, %v252
        %254 = vmatmul.f32.gmra.mxu0 %v211
        %v255 = vpop.f32.mrf.mxu0
        %v256 = vadd.f32 0.0, %v255
        %257 = vdwg.mxu0
        %vm258 = vcmask 130048
        %v260 = vsel %vm258, %v235, 0
        %v263 = vsel %vm258, %v238, 0
        %v266 = vsel %vm258, %v241, 0
        %v269 = vsel %vm258, %v244, 0
        %v272 = vsel %vm258, %v247, 0
        %v275 = vsel %vm258, %v250, 0
        %v278 = vsel %vm258, %v253, 0
        %v281 = vsel %vm258, %v256, 0
        %283 = vmatpush.msra.mxu0 0.0
        %284 = vmatpush.msra.mxu0 0.0
        %285 = vmatpush.msra.mxu0 0.0
        %286 = vmatpush.msra.mxu0 0.0
        %287 = vmatpush.msra.mxu0 0.0
        %288 = vmatpush.msra.mxu0 0.0
        %289 = vmatpush.msra.mxu0 0.0
        %290 = vmatpush.msra.mxu0 0.0
        %291 = vmatpush.msra.mxu0 0.0
        %292 = vmatpush.msra.mxu0 0.0
        %293 = vmatpush.msra.mxu0 0.0
        %294 = vmatpush.msra.mxu0 0.0
        %295 = vmatpush.msra.mxu0 0.0
        %296 = vmatpush.msra.mxu0 0.0
        %297 = vmatpush.msra.mxu0 %v184
        %298 = vmatpush.msra.mxu0 %v183
        %299 = vmatmul.f32.gmra.mxu0 %v260
        %v300 = vpop.f32.mrf.mxu0
        %v301 = vadd.f32 0.0, %v300
        %302 = vmatmul.f32.gmra.mxu0 %v263
        %v303 = vpop.f32.mrf.mxu0
        %v304 = vadd.f32 0.0, %v303
        %305 = vmatmul.f32.gmra.mxu0 %v266
        %v306 = vpop.f32.mrf.mxu0
        %v307 = vadd.f32 0.0, %v306
        %308 = vmatmul.f32.gmra.mxu0 %v269
        %v309 = vpop.f32.mrf.mxu0
        %v310 = vadd.f32 0.0, %v309
        %311 = vmatmul.f32.gmra.mxu0 %v272
        %v312 = vpop.f32.mrf.mxu0
        %v313 = vadd.f32 0.0, %v312
        %314 = vmatmul.f32.gmra.mxu0 %v275
        %v315 = vpop.f32.mrf.mxu0
        %v316 = vadd.f32 0.0, %v315
        %317 = vmatmul.f32.gmra.mxu0 %v278
        %v318 = vpop.f32.mrf.mxu0
        %v319 = vadd.f32 0.0, %v318
        %320 = vmatmul.f32.gmra.mxu0 %v281
        %v321 = vpop.f32.mrf.mxu0
        %v322 = vadd.f32 0.0, %v321
        %323 = vdwg.mxu0
        %324 = vst [vmem:[%s166] sm:$0xff] %v301
        %325 = vst [vmem:[%s166 + $0x8] sm:$0xff] %v304
        %326 = vst [vmem:[%s166 + $0x10] sm:$0xff] %v307
        %327 = vst [vmem:[%s166 + $0x18] sm:$0xff] %v310
        %328 = vst [vmem:[%s166 + $0x20] sm:$0xff] %v313
        %329 = vst [vmem:[%s166 + $0x28] sm:$0xff] %v316
        %330 = vst [vmem:[%s166 + $0x30] sm:$0xff] %v319
        %331 = vst [vmem:[%s166 + $0x38] sm:$0xff] %v322
        %s332 = scalar_lea.vmem %s172, 24
        %v333 = vld [vmem:[%s332] sm:$0xff]
        %v334 = vld [vmem:[%s332 + $0x8] sm:$0xff]
        %v335 = vld [vmem:[%s332 + $0x10] sm:$0xf]
        %v337 = vsel %vm213, %v335, 0
        %339 = vmatpush.msra.mxu0 0.0
        %340 = vmatpush.msra.mxu0 0.0
        %341 = vmatpush.msra.mxu0 0.0
        %342 = vmatpush.msra.mxu0 0.0
        %343 = vmatpush.msra.mxu0 0.0
        %344 = vmatpush.msra.mxu0 0.0
        %345 = vmatpush.msra.mxu0 0.0
        %346 = vmatpush.msra.mxu0 0.0
        %347 = vmatpush.msra.mxu0 0.0
        %348 = vmatpush.msra.mxu0 0.0
        %349 = vmatpush.msra.mxu0 0.0
        %350 = vmatpush.msra.mxu0 0.0
        %351 = vmatpush.msra.mxu0 0.0
        %352 = vmatpush.msra.mxu0 %v337
        %353 = vmatpush.msra.mxu0 %v334
        %354 = vmatpush.msra.mxu0 %v333
        %355 = vmatmul.f32.gmra.mxu0 %v190
        %v356 = vpop.f32.mrf.mxu0
        %v357 = vadd.f32 0.0, %v356
        %358 = vmatmul.f32.gmra.mxu0 %v193
        %v359 = vpop.f32.mrf.mxu0
        %v360 = vadd.f32 0.0, %v359
        %361 = vmatmul.f32.gmra.mxu0 %v196
        %v362 = vpop.f32.mrf.mxu0
        %v363 = vadd.f32 0.0, %v362
        %364 = vmatmul.f32.gmra.mxu0 %v199
        %v365 = vpop.f32.mrf.mxu0
        %v366 = vadd.f32 0.0, %v365
        %367 = vmatmul.f32.gmra.mxu0 %v202
        %v368 = vpop.f32.mrf.mxu0
        %v369 = vadd.f32 0.0, %v368
        %370 = vmatmul.f32.gmra.mxu0 %v205
        %v371 = vpop.f32.mrf.mxu0
        %v372 = vadd.f32 0.0, %v371
        %373 = vmatmul.f32.gmra.mxu0 %v208
        %v374 = vpop.f32.mrf.mxu0
        %v375 = vadd.f32 0.0, %v374
        %376 = vmatmul.f32.gmra.mxu0 %v211
        %v377 = vpop.f32.mrf.mxu0
        %v378 = vadd.f32 0.0, %v377
        %379 = vdwg.mxu0
        %v381 = vsel %vm258, %v357, 0
        %v384 = vsel %vm258, %v360, 0
        %v387 = vsel %vm258, %v363, 0
        %v390 = vsel %vm258, %v366, 0
        %v393 = vsel %vm258, %v369, 0
        %v396 = vsel %vm258, %v372, 0
        %v399 = vsel %vm258, %v375, 0
        %v402 = vsel %vm258, %v378, 0
        %404 = vmatpush.msra.mxu0 0.0
        %405 = vmatpush.msra.mxu0 0.0
        %406 = vmatpush.msra.mxu0 0.0
        %407 = vmatpush.msra.mxu0 0.0
        %408 = vmatpush.msra.mxu0 0.0
        %409 = vmatpush.msra.mxu0 0.0
        %410 = vmatpush.msra.mxu0 0.0
        %411 = vmatpush.msra.mxu0 0.0
        %412 = vmatpush.msra.mxu0 0.0
        %413 = vmatpush.msra.mxu0 0.0
        %414 = vmatpush.msra.mxu0 0.0
        %415 = vmatpush.msra.mxu0 0.0
        %416 = vmatpush.msra.mxu0 0.0
        %417 = vmatpush.msra.mxu0 0.0
        %418 = vmatpush.msra.mxu0 %v184
        %419 = vmatpush.msra.mxu0 %v183
        %420 = vmatmul.f32.gmra.mxu0 %v381
        %v421 = vpop.f32.mrf.mxu0
        %v422 = vadd.f32 0.0, %v421
        %423 = vmatmul.f32.gmra.mxu0 %v384
        %v424 = vpop.f32.mrf.mxu0
        %v425 = vadd.f32 0.0, %v424
        %426 = vmatmul.f32.gmra.mxu0 %v387
        %v427 = vpop.f32.mrf.mxu0
        %v428 = vadd.f32 0.0, %v427
        %429 = vmatmul.f32.gmra.mxu0 %v390
        %v430 = vpop.f32.mrf.mxu0
        %v431 = vadd.f32 0.0, %v430
        %432 = vmatmul.f32.gmra.mxu0 %v393
        %v433 = vpop.f32.mrf.mxu0
        %v434 = vadd.f32 0.0, %v433
        %435 = vmatmul.f32.gmra.mxu0 %v396
        %v436 = vpop.f32.mrf.mxu0
        %v437 = vadd.f32 0.0, %v436
        %438 = vmatmul.f32.gmra.mxu0 %v399
        %v439 = vpop.f32.mrf.mxu0
        %v440 = vadd.f32 0.0, %v439
        %441 = vmatmul.f32.gmra.mxu0 %v402
        %v442 = vpop.f32.mrf.mxu0
        %v443 = vadd.f32 0.0, %v442
        %444 = vdwg.mxu0
        %s445 = scalar_lea.vmem %s166, 64 [#allocation2]
        %446 = vst [vmem:[%s445] sm:$0xff] %v422
        %447 = vst [vmem:[%s445 + $0x8] sm:$0xff] %v425
        %448 = vst [vmem:[%s445 + $0x10] sm:$0xff] %v428
        %449 = vst [vmem:[%s445 + $0x18] sm:$0xff] %v431
        %450 = vst [vmem:[%s445 + $0x20] sm:$0xff] %v434
        %451 = vst [vmem:[%s445 + $0x28] sm:$0xff] %v437
        %452 = vst [vmem:[%s445 + $0x30] sm:$0xff] %v440
        %453 = vst [vmem:[%s445 + $0x38] sm:$0xff] %v443
        %s454 = sand.u32 %s93, 1
        %s455 = scalar_lea.sflag [#allocation3], %s454
        %s456 = sand.u32 %s93, 1
        %s457 = smul.addr %s456, 128
        %s458 = scalar_lea.vmem [#allocation2], %s457
        // Predicated region
        $region33: #{tpu_custom_call.1} parent=31 // pred_check
          %p459 = pneg %p103
        $region34: #{tpu_custom_call.1} parent=31 // pred_check_branch
          %461 = sbr.rel (%p459) target = $region36
        $region35: #{tpu_custom_call.1} parent=31 // pred_region
          %s462 = smul.u32 2, %s17
          %464 = vsyncadd %s455, 0
          %s465 = smul.addr %s462, 8
          %s466 = smul.addr %s465, 8
          %s467 = scalar_lea.hbm %s3, %s466
          %s468 = sshll.u32 %s458, 4
          %s469 = int_to_ptr.vmem [resolvable:$true] %s468
          %s470 = sshll.u32 %s467, 4
          %s471 = int_to_ptr.hbm [resolvable:$true] %s470
          %476 = dma.vmem_to_hbm [thread:$0]  %s469, 2048, %s471, %s455, 128, 128, 8
        $region36: #{tpu_custom_call.1} parent=31 // pred_fallthru
          _
      $region32: #{tpu_custom_call.1} parent=5 // pred_fallthru
        _
      %p477 = scmp.le.s32.totalorder 2, %s12
      // Predicated region
      $region37: #{tpu_custom_call.1} parent=5 // pred_check
        %p478 = pneg %p477
      $region38: #{tpu_custom_call.1} parent=5 // pred_check_branch
        %480 = sbr.rel (%p478) target = $region40
      $region39: #{tpu_custom_call.1} parent=5 // pred_region
        %s481 = ssub.s32 %s12, 2
        // Predicated region
        $region41: #{tpu_custom_call.1} parent=39 // pred_check
          %p482 = pneg %p109
        $region42: #{tpu_custom_call.1} parent=39 // pred_check_branch
          %484 = sbr.rel (%p482) target = $region44
        $region43: #{tpu_custom_call.1} parent=39 // pred_region
          %s485 = sand.u32 %s94, 1
          %s486 = scalar_lea.sflag [#allocation3], %s485
          %s487 = sand.u32 %s94, 1
          %s488 = smul.addr %s487, 128
          %s489 = scalar_lea.vmem [#allocation2], %s488
          %491 = dma.done %s486, 2048
        $region44: #{tpu_custom_call.1} parent=39 // pred_fallthru
          _
      $region40: #{tpu_custom_call.1} parent=5 // pred_fallthru
        _
    $region6: #{tpu_custom_call.1} parent=1 // loop_footer
      %s16 = sadd.s32 1, %s12
    $region7: #{tpu_custom_call.1} parent=1 // loop_footer_branch
      %11 = sbr.rel target = $region3
    $region8: #{tpu_custom_call.1} parent=1 // loop_exit
      _
    %492 = vsyncpa [#allocation3], 1
    %s493 = scalar_lea.sflag [#allocation3], 1
    %494 = vsyncpa %s493, 1

</llo_original>
